<compile_context>
chip_gen: v7x
topology: tpu7x:2x2x1
jax: 0.10.0
libtpu: 0.0.40
codegen_flags: <defaults>
</compile_context>

<pallas_src>
import functools

import jax
import jax.numpy as jnp
from jax.experimental import pallas as pl
from jax.experimental.pallas import tpu as pltpu

_ROW_ALIGN = 16  # sublane tile for bf16 blocks (also satisfies f32's 8)


def _mlp_kernel(x_ref, w1_ref, b1_ref, w2_ref, b2_ref, w3_ref, b3_ref, o_ref):
    # x block is already in the matmul compute dtype (bf16 by default, or f32).
    x = x_ref[...]

    # fc1 + ReLU (MXU accumulates in f32; bias add / ReLU in f32).
    h1 = jnp.dot(x, w1_ref[...], preferred_element_type=jnp.float32)
    h1 = jnp.maximum(h1 + b1_ref[...], 0.0)

    # fc2 + ReLU.
    h2 = jnp.dot(h1.astype(w2_ref.dtype), w2_ref[...],
                 preferred_element_type=jnp.float32)
    h2 = jnp.maximum(h2 + b2_ref[...], 0.0)

    # Output layer: true (tb, 16) logits, no lane padding.
    z = jnp.dot(h2.astype(w3_ref.dtype), w3_ref[...],
                preferred_element_type=jnp.float32)
    z = z + b3_ref[...]

    # log_softmax along dim=1 over exactly the real classes (numerically stable).
    z_max = jnp.max(z, axis=-1, keepdims=True)
    shifted = z - z_max
    lse = jnp.log(jnp.sum(jnp.exp(shifted), axis=-1, keepdims=True))
    o_ref[...] = (shifted - lse).astype(o_ref.dtype)


def _round_up(n, m):
    return ((n + m - 1) // m) * m


def prepare_params(params, compute_dtype=jnp.bfloat16):
    """One-time prep (hoisted out of the per-call path).

    Weights are stored [in_features, out_features] (transpose of nn.Linear) and
    cast to the MXU compute dtype; biases become (1, n) f32 rows.  NOTE: biases
    must stay f32 — all elementwise math inside the kernel is f32.
    """
    return {
        "w1": params["w1"].astype(compute_dtype),
        "w2": params["w2"].astype(compute_dtype),
        "w3": params["w3"].astype(compute_dtype),
        "b1": params["b1"].astype(jnp.float32).reshape(1, -1),
        "b2": params["b2"].astype(jnp.float32).reshape(1, -1),
        "b3": params["b3"].astype(jnp.float32).reshape(1, -1),
    }


@functools.partial(jax.jit, static_argnames=("block_rows",))
def mlp_forward(x, prepared, *, block_rows=2048):
    """x: [B, ...] (flattened to [B, D_in]); prepared: output of prepare_params."""
    w1, b1 = prepared["w1"], prepared["b1"]
    w2, b2 = prepared["w2"], prepared["b2"]
    w3, b3 = prepared["w3"], prepared["b3"]
    compute_dtype = w1.dtype
    out_n = w3.shape[1]

    B = x.shape[0]
    x2d = x.reshape(B, -1).astype(compute_dtype)
    d_in = x2d.shape[1]

    # Batch tiling: big tiles amortize the ~0.35us/step grid overhead; keep
    # >= 2 blocks when the batch allows it so the "parallel" axis can feed both
    # TensorCores on v7x (no-op on single-TC v5e/v6e).
    b_pad = _round_up(B, _ROW_ALIGN)
    tb = min(_round_up(block_rows, _ROW_ALIGN),
             _round_up(pl.cdiv(b_pad, 2), _ROW_ALIGN))
    b_pad = _round_up(b_pad, tb)
    n_blocks = b_pad // tb

    # Row-pad only when needed (feature dim is never padded).
    if b_pad != B:
        xp = jnp.zeros((b_pad, d_in), compute_dtype).at[:B, :].set(x2d)
    else:
        xp = x2d

    def resident(arr):  # same block every grid step -> stays VMEM-resident
        return pl.BlockSpec(arr.shape, lambda i: (0, 0))

    out = pl.pallas_call(
        _mlp_kernel,
        out_shape=jax.ShapeDtypeStruct((b_pad, out_n), jnp.float32),
        grid=(n_blocks,),
        in_specs=[
            pl.BlockSpec((tb, d_in), lambda i: (i, 0)),   # x: tiled over batch
            resident(w1), resident(b1),
            resident(w2), resident(b2),
            resident(w3), resident(b3),
        ],
        out_specs=pl.BlockSpec((tb, out_n), lambda i: (i, 0)),
        compiler_params=pltpu.CompilerParams(
            dimension_semantics=("parallel",),
        ),
    )(xp, w1, b1, w2, b2, w3, b3)

    return out[:B] if b_pad != B else out


def init_params(key, input_size, hidden_units1, hidden_units2, output_size):
    """Deterministic init mirroring nn.Linear (weights stored transposed [in, out])."""
    ks = jax.random.split(key, 6)

    def linear(kw, kb, fan_in, fan_out):
        bound = 1.0 / jnp.sqrt(fan_in)
        w = jax.random.uniform(kw, (fan_in, fan_out), jnp.float32, -bound, bound)
        b = jax.random.uniform(kb, (fan_out,), jnp.float32, -bound, bound)
        return w, b

    w1, b1 = linear(ks[0], ks[1], input_size, hidden_units1)
    w2, b2 = linear(ks[2], ks[3], hidden_units1, hidden_units2)
    w3, b3 = linear(ks[4], ks[5], hidden_units2, output_size)
    return {"w1": w1, "b1": b1, "w2": w2, "b2": b2, "w3": w3, "b3": b3}


def ref_forward(x, params, compute_dtype=jnp.float32):
    """Pure-JAX reference matching the kernel's numerics (same compute dtype)."""
    xf = x.reshape(x.shape[0], -1).astype(compute_dtype)
    w1 = params["w1"].astype(compute_dtype)
    w2 = params["w2"].astype(compute_dtype)
    w3 = params["w3"].astype(compute_dtype)
    h1 = jnp.maximum(
        jnp.dot(xf, w1, preferred_element_type=jnp.float32) + params["b1"], 0.0)
    h2 = jnp.maximum(
        jnp.dot(h1.astype(compute_dtype), w2, preferred_element_type=jnp.float32)
        + params["b2"], 0.0)
    z = (jnp.dot(h2.astype(compute_dtype), w3, preferred_element_type=jnp.float32)
         + params["b3"])
    return jax.nn.log_softmax(z, axis=1)


if __name__ == "__main__":
    key = jax.random.PRNGKey(0)
    k_x, k_x2, k_p = jax.random.split(key, 3)

    # Shapes consistent with the module: input_size = 1*8*8 = 64,
    # hidden1 = 32, hidden2 = 32, output = 16.
    B, C, H, W = 8, 1, 8, 8
    input_size, hidden1, hidden2, output_size = C * H * W, 32, 32, 16

    params = init_params(k_p, input_size, hidden1, hidden2, output_size)
    prepared_f32 = prepare_params(params, jnp.float32)     # exact-semantics path
    prepared_bf16 = prepare_params(params, jnp.bfloat16)   # default fast path

    # --- run 1: small batch, f32 weights (exact-semantics path) -------------
    x = jax.random.normal(k_x, (B, C, H, W), jnp.float32)
    out = mlp_forward(x, prepared_f32)
    jax.block_until_ready(out)
    ref = ref_forward(x, params, jnp.float32)
    assert out.shape == (B, output_size)
    assert jnp.allclose(out, ref, atol=1e-5, rtol=1e-5)

    # --- run 2: batch that doesn't divide the tile -> row padding + 2 grid
    # blocks (exercises the "parallel" batch split) ---------------------------
    B2 = 300
    x_big = jax.random.normal(k_x2, (B2, C, H, W), jnp.float32)
    out_big = mlp_forward(x_big, prepared_f32)
    jax.block_until_ready(out_big)
    ref_big = ref_forward(x_big, params, jnp.float32)
    assert out_big.shape == (B2, output_size)
    assert jnp.allclose(out_big, ref_big, atol=1e-5, rtol=1e-5)

    # --- run 3: default bf16 matmul path (halves x/weight DMA bytes); all
    # elementwise math stays f32 inside the kernel. Compared vs bf16-consistent ref.
    out_bf16 = mlp_forward(x_big, prepared_bf16)
    jax.block_until_ready(out_bf16)
    ref_bf16 = ref_forward(x_big, params, jnp.bfloat16)
    assert out_bf16.shape == (B2, output_size)
    assert jnp.allclose(out_bf16, ref_bf16, atol=2e-2, rtol=2e-2)

    print("KERNEL_OK")
</pallas_src>

<mosaic_0001>
module attributes {stable_mosaic.version = 11 : i64} {
  func.func @_mlp_kernel(%arg0: i32, %arg1: memref<16x64xf32, #tpu.memory_space<vmem>>, %arg2: memref<64x32xf32, #tpu.memory_space<vmem>>, %arg3: memref<1x32xf32, #tpu.memory_space<vmem>>, %arg4: memref<32x32xf32, #tpu.memory_space<vmem>>, %arg5: memref<1x32xf32, #tpu.memory_space<vmem>>, %arg6: memref<32x16xf32, #tpu.memory_space<vmem>>, %arg7: memref<1x16xf32, #tpu.memory_space<vmem>>, %arg8: memref<16x16xf32, #tpu.memory_space<vmem>>) attributes {dimension_semantics = [#tpu.dimension_semantics<parallel>], iteration_bounds = array<i64: 1>, scalar_prefetch = 0 : i64, scratch_operands = 0 : i64, tpu.core_type = #tpu.core_type<tc>, window_params = [{transform_indices = @transform_0, window_bounds = array<i64: 16, 64>}, {pipeline_mode = #tpu.pipeline_mode<synchronous>, transform_indices = @transform_1, window_bounds = array<i64: 64, 32>}, {pipeline_mode = #tpu.pipeline_mode<synchronous>, transform_indices = @transform_2, window_bounds = array<i64: 1, 32>}, {pipeline_mode = #tpu.pipeline_mode<synchronous>, transform_indices = @transform_3, window_bounds = array<i64: 32, 32>}, {pipeline_mode = #tpu.pipeline_mode<synchronous>, transform_indices = @transform_4, window_bounds = array<i64: 1, 32>}, {pipeline_mode = #tpu.pipeline_mode<synchronous>, transform_indices = @transform_5, window_bounds = array<i64: 32, 16>}, {pipeline_mode = #tpu.pipeline_mode<synchronous>, transform_indices = @transform_6, window_bounds = array<i64: 1, 16>}, {transform_indices = @transform_7, window_bounds = array<i64: 16, 16>}]} {
    %c0 = arith.constant 0 : index
    %c0_0 = arith.constant 0 : index
    %0 = vector.load %arg1[%c0, %c0_0] : memref<16x64xf32, #tpu.memory_space<vmem>>, vector<16x64xf32>
    %c0_1 = arith.constant 0 : index
    %c0_2 = arith.constant 0 : index
    %1 = vector.load %arg2[%c0_1, %c0_2] : memref<64x32xf32, #tpu.memory_space<vmem>>, vector<64x32xf32>
    %cst = arith.constant dense<0.000000e+00> : vector<16x32xf32>
    %2 = tpu.matmul %0, %1, %cst {dimension_numbers = #tpu.dot_dimension_numbers<[1], [0], [0], [1], [0, 0, 1, 1], [], []>} : vector<16x64xf32>, vector<64x32xf32>, vector<16x32xf32> -> vector<16x32xf32>
    %c0_3 = arith.constant 0 : index
    %c0_4 = arith.constant 0 : index
    %3 = vector.load %arg3[%c0_3, %c0_4] : memref<1x32xf32, #tpu.memory_space<vmem>>, vector<1x32xf32>
    %4 = vector.broadcast %3 : vector<1x32xf32> to vector<16x32xf32>
    %5 = arith.addf %2, %4 : vector<16x32xf32>
    %cst_5 = arith.constant 0.000000e+00 : f32
    %6 = vector.broadcast %cst_5 : f32 to vector<16x32xf32>
    %7 = arith.maximumf %5, %6 : vector<16x32xf32>
    %c0_6 = arith.constant 0 : index
    %c0_7 = arith.constant 0 : index
    %8 = vector.load %arg4[%c0_6, %c0_7] : memref<32x32xf32, #tpu.memory_space<vmem>>, vector<32x32xf32>
    %cst_8 = arith.constant dense<0.000000e+00> : vector<16x32xf32>
    %9 = tpu.matmul %7, %8, %cst_8 {dimension_numbers = #tpu.dot_dimension_numbers<[1], [0], [0], [1], [0, 0, 1, 1], [], []>} : vector<16x32xf32>, vector<32x32xf32>, vector<16x32xf32> -> vector<16x32xf32>
    %c0_9 = arith.constant 0 : index
    %c0_10 = arith.constant 0 : index
    %10 = vector.load %arg5[%c0_9, %c0_10] : memref<1x32xf32, #tpu.memory_space<vmem>>, vector<1x32xf32>
    %11 = vector.broadcast %10 : vector<1x32xf32> to vector<16x32xf32>
    %12 = arith.addf %9, %11 : vector<16x32xf32>
    %cst_11 = arith.constant 0.000000e+00 : f32
    %13 = vector.broadcast %cst_11 : f32 to vector<16x32xf32>
    %14 = arith.maximumf %12, %13 : vector<16x32xf32>
    %c0_12 = arith.constant 0 : index
    %c0_13 = arith.constant 0 : index
    %15 = vector.load %arg6[%c0_12, %c0_13] : memref<32x16xf32, #tpu.memory_space<vmem>>, vector<32x16xf32>
    %cst_14 = arith.constant dense<0.000000e+00> : vector<16x16xf32>
    %16 = tpu.matmul %14, %15, %cst_14 {dimension_numbers = #tpu.dot_dimension_numbers<[1], [0], [0], [1], [0, 0, 1, 1], [], []>} : vector<16x32xf32>, vector<32x16xf32>, vector<16x16xf32> -> vector<16x16xf32>
    %c0_15 = arith.constant 0 : index
    %c0_16 = arith.constant 0 : index
    %17 = vector.load %arg7[%c0_15, %c0_16] : memref<1x16xf32, #tpu.memory_space<vmem>>, vector<1x16xf32>
    %18 = vector.broadcast %17 : vector<1x16xf32> to vector<16x16xf32>
    %19 = arith.addf %16, %18 : vector<16x16xf32>
    %cst_17 = arith.constant dense<0xFF800000> : vector<16xf32>
    %20 = vector.multi_reduction <maximumf>, %19, %cst_17 [1] : vector<16x16xf32> to vector<16xf32>
    %21 = vector.shape_cast %20 : vector<16xf32> to vector<16x1xf32>
    %22 = vector.broadcast %21 : vector<16x1xf32> to vector<16x16xf32>
    %23 = arith.subf %19, %22 : vector<16x16xf32>
    %24 = math.exp %23 : vector<16x16xf32>
    %cst_18 = arith.constant dense<0.000000e+00> : vector<16xf32>
    %25 = vector.multi_reduction <add>, %24, %cst_18 [1] : vector<16x16xf32> to vector<16xf32>
    %26 = vector.shape_cast %25 : vector<16xf32> to vector<16x1xf32>
    %27 = math.log %26 : vector<16x1xf32>
    %28 = vector.broadcast %27 : vector<16x1xf32> to vector<16x16xf32>
    %29 = arith.subf %23, %28 : vector<16x16xf32>
    %c0_19 = arith.constant 0 : index
    %c0_20 = arith.constant 0 : index
    %30 = vector.load %arg8[%c0_19, %c0_20] : memref<16x16xf32, #tpu.memory_space<vmem>>, vector<16x16xf32>
    tpu.vector_store %arg8[%c0_19, %c0_20], %29 {strides = array<i32>} : memref<16x16xf32, #tpu.memory_space<vmem>>, vector<16x16xf32>,
    return
  }
  func.func @transform_0(%arg0: i32) -> (i32, i32) {
    %c0_i32 = arith.constant 0 : i32
    %c0_i32_0 = arith.constant 0 : i32
    return %arg0, %c0_i32 : i32, i32
  }
  func.func @transform_1(%arg0: i32) -> (i32, i32) {
    %c0_i32 = arith.constant 0 : i32
    %c0_i32_0 = arith.constant 0 : i32
    %c0_i32_1 = arith.constant 0 : i32
    return %c0_i32, %c0_i32_0 : i32, i32
  }
  func.func @transform_2(%arg0: i32) -> (i32, i32) {
    %c0_i32 = arith.constant 0 : i32
    %c0_i32_0 = arith.constant 0 : i32
    %c0_i32_1 = arith.constant 0 : i32
    return %c0_i32, %c0_i32_0 : i32, i32
  }
  func.func @transform_3(%arg0: i32) -> (i32, i32) {
    %c0_i32 = arith.constant 0 : i32
    %c0_i32_0 = arith.constant 0 : i32
    %c0_i32_1 = arith.constant 0 : i32
    return %c0_i32, %c0_i32_0 : i32, i32
  }
  func.func @transform_4(%arg0: i32) -> (i32, i32) {
    %c0_i32 = arith.constant 0 : i32
    %c0_i32_0 = arith.constant 0 : i32
    %c0_i32_1 = arith.constant 0 : i32
    return %c0_i32, %c0_i32_0 : i32, i32
  }
  func.func @transform_5(%arg0: i32) -> (i32, i32) {
    %c0_i32 = arith.constant 0 : i32
    %c0_i32_0 = arith.constant 0 : i32
    %c0_i32_1 = arith.constant 0 : i32
    return %c0_i32, %c0_i32_0 : i32, i32
  }
  func.func @transform_6(%arg0: i32) -> (i32, i32) {
    %c0_i32 = arith.constant 0 : i32
    %c0_i32_0 = arith.constant 0 : i32
    %c0_i32_1 = arith.constant 0 : i32
    return %c0_i32, %c0_i32_0 : i32, i32
  }
  func.func @transform_7(%arg0: i32) -> (i32, i32) {
    %c0_i32 = arith.constant 0 : i32
    %c0_i32_0 = arith.constant 0 : i32
    return %arg0, %c0_i32 : i32, i32
  }
}

</mosaic_0001>

<llo_original>
// kernel: mlp_forward.1
$region0: #{mlp_forward.1}
  #allocation0 [shape = 'u32[]', space=smem, size = 0x4, offset = 0x4, fixed_abs, tag = 'smem constant byte address 0x4 - core index']
  #allocation1 [shape = 'u32[144,128]{1,0:T(1,128)}', space=vmem, size = 0x12000, scoped, tag = 'internal scratch']
  %s0 = inlined_call_operand.vmem [shape: f32[16,64], index: 0, kind: input, shape index: {}]
  %s1 = inlined_call_operand.vmem [shape: f32[64,32], index: 1, kind: input, shape index: {}]
  %s2 = inlined_call_operand.vmem [shape: f32[1,32], index: 2, kind: input, shape index: {}]
  %s3 = inlined_call_operand.vmem [shape: f32[32,32], index: 3, kind: input, shape index: {}]
  %s4 = inlined_call_operand.vmem [shape: f32[1,32], index: 4, kind: input, shape index: {}]
  %s5 = inlined_call_operand.vmem [shape: f32[32,16], index: 5, kind: input, shape index: {}]
  %s6 = inlined_call_operand.vmem [shape: f32[1,16], index: 6, kind: input, shape index: {}]
  %s7 = inlined_call_operand.vmem [shape: f32[16,16], index: 7, kind: output, shape index: {}]
  %s8 = sld [smem:[#allocation0]]
  $region38: #{mlp_forward.1} parent=0
    _
  %s10 = ssub.s32 1, %s8
  %s11 = scalar_select 0, %s10, %s8
  // Predicated region
  $region2: #{mlp_forward.1} parent=0 // pred_check
    _
  $region3: #{mlp_forward.1} parent=0 // pred_check_branch
    %13 = sbr.rel (0) target = $region5
  $region4: #{mlp_forward.1} parent=0 // pred_region
    _
  $region5: #{mlp_forward.1} parent=0 // pred_fallthru
    _
  // Predicated region
  $region6: #{mlp_forward.1} parent=0 // pred_check
    _
  $region7: #{mlp_forward.1} parent=0 // pred_check_branch
    %15 = sbr.rel (0) target = $region9
  $region8: #{mlp_forward.1} parent=0 // pred_region
    _
  $region9: #{mlp_forward.1} parent=0 // pred_fallthru
    _
  // Predicated region
  $region10: #{mlp_forward.1} parent=0 // pred_check
    _
  $region11: #{mlp_forward.1} parent=0 // pred_check_branch
    %17 = sbr.rel (0) target = $region13
  $region12: #{mlp_forward.1} parent=0 // pred_region
    _
  $region13: #{mlp_forward.1} parent=0 // pred_fallthru
    _
  // Predicated region
  $region14: #{mlp_forward.1} parent=0 // pred_check
    _
  $region15: #{mlp_forward.1} parent=0 // pred_check_branch
    %19 = sbr.rel (0) target = $region17
  $region16: #{mlp_forward.1} parent=0 // pred_region
    _
  $region17: #{mlp_forward.1} parent=0 // pred_fallthru
    _
  // Predicated region
  $region18: #{mlp_forward.1} parent=0 // pred_check
    _
  $region19: #{mlp_forward.1} parent=0 // pred_check_branch
    %21 = sbr.rel (0) target = $region21
  $region20: #{mlp_forward.1} parent=0 // pred_region
    _
  $region21: #{mlp_forward.1} parent=0 // pred_fallthru
    _
  // Predicated region
  $region22: #{mlp_forward.1} parent=0 // pred_check
    _
  $region23: #{mlp_forward.1} parent=0 // pred_check_branch
    %23 = sbr.rel (0) target = $region25
  $region24: #{mlp_forward.1} parent=0 // pred_region
    _
  $region25: #{mlp_forward.1} parent=0 // pred_fallthru
    _
  // Predicated region
  $region26: #{mlp_forward.1} parent=0 // pred_check
    _
  $region27: #{mlp_forward.1} parent=0 // pred_check_branch
    %25 = sbr.rel (0) target = $region29
  $region28: #{mlp_forward.1} parent=0 // pred_region
    _
  $region29: #{mlp_forward.1} parent=0 // pred_fallthru
    _
  %v26 = vld [vmem:[%s0] sm:$0xff]
  %v27 = vld [vmem:[%s0 + $0x8] sm:$0xff]
  %v28 = vld [vmem:[%s1] sm:$0xff]
  %v29 = vld [vmem:[%s1 + $0x8] sm:$0xff]
  %v30 = vld [vmem:[%s1 + $0x10] sm:$0xff]
  %v31 = vld [vmem:[%s1 + $0x18] sm:$0xff]
  %v32 = vld [vmem:[%s1 + $0x20] sm:$0xff]
  %v33 = vld [vmem:[%s1 + $0x28] sm:$0xff]
  %v34 = vld [vmem:[%s1 + $0x30] sm:$0xff]
  %v35 = vld [vmem:[%s1 + $0x38] sm:$0xff]
  %v36 = vld [vmem:[%s2] sm:$0x1]
  %v38 = vlaneseq
  %v39 = vshrl.u32 %v38, 7
  %v40 = vsub.s32 0, %v39
  %v41 = vrot.slane %v36, %v40
  %vm43 = vcmask 523264
  %v45 = vsel %vm43, %v26, 0
  %v48 = vsel %vm43, %v27, 0
  %50 = vmatprep.subr.mxu0 0.0
  %51 = vmatpush1.msra.mxu0 %v28
  %52 = vmatprep.subr.mxu0 0.0
  %53 = vmatpush1.msra.mxu0 %v29
  %54 = vmatprep.subr.mxu0 0.0
  %55 = vmatpush1.msra.mxu0 %v30
  %56 = vmatprep.subr.mxu0 0.0
  %57 = vmatpush1.msra.mxu0 %v31
  %58 = vmatprep.subr.mxu0 0.0
  %59 = vmatpush1.msra.mxu0 %v32
  %60 = vmatprep.subr.mxu0 0.0
  %61 = vmatpush1.msra.mxu0 %v33
  %62 = vmatprep.subr.mxu0 0.0
  %63 = vmatpush1.msra.mxu0 %v34
  %64 = vmatprep.subr.mxu0 0.0
  %65 = vmatpush1.msra.mxu0 %v35
  %66 = vmatprep.subr.mxu0 0.0
  %67 = vmatpush1.msra.mxu0 0.0
  %68 = vmatprep.subr.mxu0 0.0
  %69 = vmatpush1.msra.mxu0 0.0
  %70 = vmatprep.subr.mxu0 0.0
  %71 = vmatpush1.msra.mxu0 0.0
  %72 = vmatprep.subr.mxu0 0.0
  %73 = vmatpush1.msra.mxu0 0.0
  %74 = vmatprep.subr.mxu0 0.0
  %75 = vmatpush1.msra.mxu0 0.0
  %76 = vmatprep.subr.mxu0 0.0
  %77 = vmatpush1.msra.mxu0 0.0
  %78 = vmatprep.subr.mxu0 0.0
  %79 = vmatpush1.msra.mxu0 0.0
  %80 = vmatprep.subr.mxu0 0.0
  %81 = vmatpush1.msra.mxu0 0.0
  %82 = vmatprep.subr.mxu0 0.0
  %83 = vmatpush1.msra.mxu0 0.0
  %84 = vmatprep.subr.mxu0 0.0
  %85 = vmatpush1.msra.mxu0 0.0
  %86 = vmatprep.subr.mxu0 0.0
  %87 = vmatpush1.msra.mxu0 0.0
  %88 = vmatprep.subr.mxu0 0.0
  %89 = vmatpush1.msra.mxu0 0.0
  %90 = vmatprep.subr.mxu0 0.0
  %91 = vmatpush1.msra.mxu0 0.0
  %92 = vmatprep.subr.mxu0 0.0
  %93 = vmatpush1.msra.mxu0 0.0
  %94 = vmatprep.subr.mxu0 0.0
  %95 = vmatpush1.msra.mxu0 0.0
  %96 = vmatprep.subr.mxu0 0.0
  %97 = vmatpush1.msra.mxu0 0.0
  %98 = vmatprep.subr.mxu0 0.0
  %99 = vmatpush1.msra.mxu0 0.0
  %100 = vmatprep.subr.mxu0 0.0
  %101 = vmatpush1.msra.mxu0 0.0
  %102 = vmatprep.subr.mxu0 0.0
  %103 = vmatpush1.msra.mxu0 0.0
  %104 = vmatprep.subr.mxu0 0.0
  %105 = vmatpush1.msra.mxu0 0.0
  %106 = vmatprep.subr.mxu0 0.0
  %107 = vmatpush1.msra.mxu0 0.0
  %108 = vmatprep.subr.mxu0 0.0
  %109 = vmatpush1.msra.mxu0 0.0
  %110 = vmatprep.subr.mxu0 0.0
  %111 = vmatpush1.msra.mxu0 0.0
  %112 = vmatprep.subr.mxu0 0.0
  %113 = vmatpush1.msra.mxu0 0.0
  %114 = vmatprep.mubr.f32.mxu0 0.0
  %115 = vmatmul.mubr.f32.gmra.mrb[0].mxu0 %v45
  %v116 = vpop.f32.mrb[0].mxu0
  %v117 = vadd.f32 %v41, %v116
  %v118 = vpop.f32.mrb[0].mxu0
  %119 = vmatprep.mubr.f32.mxu0 0.0
  %120 = vmatmul.mubr.f32.gmra.mrb[0].mxu0 %v48
  %v121 = vpop.f32.mrb[0].mxu0
  %v122 = vadd.f32 %v41, %v121
  %v123 = vpop.f32.mrb[0].mxu0
  %124 = vdwg.mxu0
  %v125 = vmax.f32 %v117, 0.0
  %v126 = vmax.f32 %v122, 0.0
  %v127 = vld [vmem:[%s3] sm:$0xff]
  %v128 = vld [vmem:[%s3 + $0x8] sm:$0xff]
  %v129 = vld [vmem:[%s3 + $0x10] sm:$0xff]
  %v130 = vld [vmem:[%s3 + $0x18] sm:$0xff]
  %v131 = vld [vmem:[%s4] sm:$0x1]
  %v133 = vlaneseq
  %v134 = vshrl.u32 %v133, 7
  %v135 = vsub.s32 0, %v134
  %v136 = vrot.slane %v131, %v135
  %vm138 = vcmask 261120
  %v140 = vsel %vm138, %v125, 0
  %v143 = vsel %vm138, %v126, 0
  %145 = vmatprep.subr.mxu0 0.0
  %146 = vmatpush1.msra.mxu0 %v127
  %147 = vmatprep.subr.mxu0 0.0
  %148 = vmatpush1.msra.mxu0 %v128
  %149 = vmatprep.subr.mxu0 0.0
  %150 = vmatpush1.msra.mxu0 %v129
  %151 = vmatprep.subr.mxu0 0.0
  %152 = vmatpush1.msra.mxu0 %v130
  %153 = vmatprep.subr.mxu0 0.0
  %154 = vmatpush1.msra.mxu0 0.0
  %155 = vmatprep.subr.mxu0 0.0
  %156 = vmatpush1.msra.mxu0 0.0
  %157 = vmatprep.subr.mxu0 0.0
  %158 = vmatpush1.msra.mxu0 0.0
  %159 = vmatprep.subr.mxu0 0.0
  %160 = vmatpush1.msra.mxu0 0.0
  %161 = vmatprep.subr.mxu0 0.0
  %162 = vmatpush1.msra.mxu0 0.0
  %163 = vmatprep.subr.mxu0 0.0
  %164 = vmatpush1.msra.mxu0 0.0
  %165 = vmatprep.subr.mxu0 0.0
  %166 = vmatpush1.msra.mxu0 0.0
  %167 = vmatprep.subr.mxu0 0.0
  %168 = vmatpush1.msra.mxu0 0.0
  %169 = vmatprep.subr.mxu0 0.0
  %170 = vmatpush1.msra.mxu0 0.0
  %171 = vmatprep.subr.mxu0 0.0
  %172 = vmatpush1.msra.mxu0 0.0
  %173 = vmatprep.subr.mxu0 0.0
  %174 = vmatpush1.msra.mxu0 0.0
  %175 = vmatprep.subr.mxu0 0.0
  %176 = vmatpush1.msra.mxu0 0.0
  %177 = vmatprep.subr.mxu0 0.0
  %178 = vmatpush1.msra.mxu0 0.0
  %179 = vmatprep.subr.mxu0 0.0
  %180 = vmatpush1.msra.mxu0 0.0
  %181 = vmatprep.subr.mxu0 0.0
  %182 = vmatpush1.msra.mxu0 0.0
  %183 = vmatprep.subr.mxu0 0.0
  %184 = vmatpush1.msra.mxu0 0.0
  %185 = vmatprep.subr.mxu0 0.0
  %186 = vmatpush1.msra.mxu0 0.0
  %187 = vmatprep.subr.mxu0 0.0
  %188 = vmatpush1.msra.mxu0 0.0
  %189 = vmatprep.subr.mxu0 0.0
  %190 = vmatpush1.msra.mxu0 0.0
  %191 = vmatprep.subr.mxu0 0.0
  %192 = vmatpush1.msra.mxu0 0.0
  %193 = vmatprep.subr.mxu0 0.0
  %194 = vmatpush1.msra.mxu0 0.0
  %195 = vmatprep.subr.mxu0 0.0
  %196 = vmatpush1.msra.mxu0 0.0
  %197 = vmatprep.subr.mxu0 0.0
  %198 = vmatpush1.msra.mxu0 0.0
  %199 = vmatprep.subr.mxu0 0.0
  %200 = vmatpush1.msra.mxu0 0.0
  %201 = vmatprep.subr.mxu0 0.0
  %202 = vmatpush1.msra.mxu0 0.0
  %203 = vmatprep.subr.mxu0 0.0
  %204 = vmatpush1.msra.mxu0 0.0
  %205 = vmatprep.subr.mxu0 0.0
  %206 = vmatpush1.msra.mxu0 0.0
  %207 = vmatprep.subr.mxu0 0.0
  %208 = vmatpush1.msra.mxu0 0.0
  %209 = vmatprep.mubr.f32.mxu0 0.0
  %210 = vmatmul.mubr.f32.gmra.mrb[0].mxu0 %v140
  %v211 = vpop.f32.mrb[0].mxu0
  %v212 = vadd.f32 %v136, %v211
  %v213 = vpop.f32.mrb[0].mxu0
  %214 = vmatprep.mubr.f32.mxu0 0.0
  %215 = vmatmul.mubr.f32.gmra.mrb[0].mxu0 %v143
  %v216 = vpop.f32.mrb[0].mxu0
  %v217 = vadd.f32 %v136, %v216
  %v218 = vpop.f32.mrb[0].mxu0
  %219 = vdwg.mxu0
  %v220 = vmax.f32 %v212, 0.0
  %v221 = vmax.f32 %v217, 0.0
  %v222 = vld [vmem:[%s5] sm:$0xff]
  %v223 = vld [vmem:[%s5 + $0x8] sm:$0xff]
  %v224 = vld [vmem:[%s5 + $0x10] sm:$0xff]
  %v225 = vld [vmem:[%s5 + $0x18] sm:$0xff]
  %v226 = vld [vmem:[%s6] sm:$0x1]
  %v228 = vlaneseq
  %v229 = vshrl.u32 %v228, 7
  %v230 = vsub.s32 0, %v229
  %v231 = vrot.slane %v226, %v230
  %v234 = vsel %vm138, %v220, 0
  %v237 = vsel %vm138, %v221, 0
  %239 = vmatprep.subr.mxu0 0.0
  %240 = vmatpush1.msra.mxu0 %v222
  %241 = vmatprep.subr.mxu0 0.0
  %242 = vmatpush1.msra.mxu0 %v223
  %243 = vmatprep.subr.mxu0 0.0
  %244 = vmatpush1.msra.mxu0 %v224
  %245 = vmatprep.subr.mxu0 0.0
  %246 = vmatpush1.msra.mxu0 %v225
  %247 = vmatprep.subr.mxu0 0.0
  %248 = vmatpush1.msra.mxu0 0.0
  %249 = vmatprep.subr.mxu0 0.0
  %250 = vmatpush1.msra.mxu0 0.0
  %251 = vmatprep.subr.mxu0 0.0
  %252 = vmatpush1.msra.mxu0 0.0
  %253 = vmatprep.subr.mxu0 0.0
  %254 = vmatpush1.msra.mxu0 0.0
  %255 = vmatprep.subr.mxu0 0.0
  %256 = vmatpush1.msra.mxu0 0.0
  %257 = vmatprep.subr.mxu0 0.0
  %258 = vmatpush1.msra.mxu0 0.0
  %259 = vmatprep.subr.mxu0 0.0
  %260 = vmatpush1.msra.mxu0 0.0
  %261 = vmatprep.subr.mxu0 0.0
  %262 = vmatpush1.msra.mxu0 0.0
  %263 = vmatprep.subr.mxu0 0.0
  %264 = vmatpush1.msra.mxu0 0.0
  %265 = vmatprep.subr.mxu0 0.0
  %266 = vmatpush1.msra.mxu0 0.0
  %267 = vmatprep.subr.mxu0 0.0
  %268 = vmatpush1.msra.mxu0 0.0
  %269 = vmatprep.subr.mxu0 0.0
  %270 = vmatpush1.msra.mxu0 0.0
  %271 = vmatprep.subr.mxu0 0.0
  %272 = vmatpush1.msra.mxu0 0.0
  %273 = vmatprep.subr.mxu0 0.0
  %274 = vmatpush1.msra.mxu0 0.0
  %275 = vmatprep.subr.mxu0 0.0
  %276 = vmatpush1.msra.mxu0 0.0
  %277 = vmatprep.subr.mxu0 0.0
  %278 = vmatpush1.msra.mxu0 0.0
  %279 = vmatprep.subr.mxu0 0.0
  %280 = vmatpush1.msra.mxu0 0.0
  %281 = vmatprep.subr.mxu0 0.0
  %282 = vmatpush1.msra.mxu0 0.0
  %283 = vmatprep.subr.mxu0 0.0
  %284 = vmatpush1.msra.mxu0 0.0
  %285 = vmatprep.subr.mxu0 0.0
  %286 = vmatpush1.msra.mxu0 0.0
  %287 = vmatprep.subr.mxu0 0.0
  %288 = vmatpush1.msra.mxu0 0.0
  %289 = vmatprep.subr.mxu0 0.0
  %290 = vmatpush1.msra.mxu0 0.0
  %291 = vmatprep.subr.mxu0 0.0
  %292 = vmatpush1.msra.mxu0 0.0
  %293 = vmatprep.subr.mxu0 0.0
  %294 = vmatpush1.msra.mxu0 0.0
  %295 = vmatprep.subr.mxu0 0.0
  %296 = vmatpush1.msra.mxu0 0.0
  %297 = vmatprep.subr.mxu0 0.0
  %298 = vmatpush1.msra.mxu0 0.0
  %299 = vmatprep.subr.mxu0 0.0
  %300 = vmatpush1.msra.mxu0 0.0
  %301 = vmatprep.subr.mxu0 0.0
  %302 = vmatpush1.msra.mxu0 0.0
  %303 = vmatprep.mubr.f32.mxu0 0.0
  %304 = vmatmul.mubr.f32.gmra.mrb[0].mxu0 %v234
  %v305 = vpop.f32.mrb[0].mxu0
  %v306 = vadd.f32 %v231, %v305
  %v307 = vpop.f32.mrb[0].mxu0
  %308 = vmatprep.mubr.f32.mxu0 0.0
  %309 = vmatmul.mubr.f32.gmra.mrb[0].mxu0 %v237
  %v310 = vpop.f32.mrb[0].mxu0
  %v311 = vadd.f32 %v231, %v310
  %v312 = vpop.f32.mrb[0].mxu0
  %313 = vdwg.mxu0
  %vm314 = vcmask 130048
  %v315 = vsel %vm314, %v306, -inf
  %316 = vmax.xlane.f32.xlu0 %v315
  %v317 = vpop.xlane.xlu0 %316
  %v318 = vsel %vm314, %v311, -inf
  %319 = vmax.xlane.f32.xlu0 %v318
  %v320 = vpop.xlane.xlu0 %319
  %v321 = vsub.f32 %v306, %v317
  %v322 = vsub.f32 %v311, %v320
  %v323 = vmul.f32 %v321, 1.442695
  %v324 = vpow.pop %v323
  %v325 = vmul.f32 %v322, 1.442695
  %v326 = vpow.pop %v325
  %v327 = vsel %vm314, %v324, 0.0
  %328 = vadd.xlane.f32.xlu0 %v327
  %v329 = vpop.xlane.xlu0 %328
  %v330 = vsel %vm314, %v326, 0.0
  %331 = vadd.xlane.f32.xlu0 %v330
  %v332 = vpop.xlane.xlu0 %331
  %v333 = vlog2.pop %v329
  %v334 = vmul.f32 %v333, 0.6931472
  %v335 = vlog2.pop %v332
  %v336 = vmul.f32 %v335, 0.6931472
  %v337 = vsub.f32 %v321, %v334
  %v338 = vsub.f32 %v322, %v336
  %339 = vst.msk [vmem:[%s7] sm:$0xff] %vm314, %v337
  %340 = vst.msk [vmem:[%s7 + $0x8] sm:$0xff] %vm314, %v338
  // Predicated region
  $region30: #{mlp_forward.1} parent=0 // pred_check
    _
  $region31: #{mlp_forward.1} parent=0 // pred_check_branch
    %342 = sbr.rel (0) target = $region33
  $region32: #{mlp_forward.1} parent=0 // pred_region
    _
  $region33: #{mlp_forward.1} parent=0 // pred_fallthru
    _
  // Predicated region
  $region34: #{mlp_forward.1} parent=0 // pred_check
    _
  $region35: #{mlp_forward.1} parent=0 // pred_check_branch
    %344 = sbr.rel (0) target = $region37
  $region36: #{mlp_forward.1} parent=0 // pred_region
    _
  $region37: #{mlp_forward.1} parent=0 // pred_fallthru
    _

</llo_original>
